<compile_context>
chip_gen: v6e
topology: v6e:2x2x1
jax: 0.10.0
libtpu: 0.0.40
codegen_flags: <defaults>
</compile_context>

<pallas_src>
import math

import jax
import jax.numpy as jnp
from jax import lax
from jax.experimental import pallas as pl
from jax.experimental.pallas import tpu as pltpu


# ----------------------------------------------------------------------------
# Shared compute: BN-scale-folded depthwise taps on a lane-packed (W*C) tile.
# ----------------------------------------------------------------------------
def _dwconv_compute(x, w, b, tH, KH, KW, C, WC, apply_relu):
    # x: (tH + KH - 1, Wp*C) f32 (rows incl. halo), w: (KH*KW, W*C), b: (W*C,)
    acc = None
    for kw_i in range(KW):
        # kw tap shift lives on the lane axis (shift = kw*C); XLU lane work
        # co-issues with the VPU FMAs.
        # TODO(synk): if a bundle dump at large tiles shows XLU saturation,
        # switch to pltpu.roll + aligned slice or per-tap ref loads.
        xs = x[:, kw_i * C: kw_i * C + WC]           # (tHp, W*C)
        for kh in range(KH):
            tap = xs[kh:kh + tH, :] * w[kh * KW + kw_i]
            acc = tap if acc is None else acc + tap
    y = acc + b                                      # folded BN (eval stats)
    if apply_relu:
        y = jnp.maximum(y, 0.0)
    return y


# Path A: whole padded row-slab per grid step (auto BlockSpec pipelining).
def make_dwconv_auto_kernel(H, KH, KW, C, WC, apply_relu):
    def kernel(x_ref, w_ref, b_ref, o_ref):
        # x_ref: (1, Hp, Wp*C), w_ref: (KH*KW, W*C), b_ref: (1, W*C)
        # o_ref: (1, H, W*C)
        x = x_ref[0].astype(jnp.float32)
        y = _dwconv_compute(x, w_ref[...], b_ref[0, :], H, KH, KW, C, WC,
                            apply_relu)
        o_ref[0] = y.astype(o_ref.dtype)
    return kernel


# Path B: H-tiled, input stays in HBM (pl.ANY); manual double-buffered DMA of
# the halo'd row tile -> no halo duplication in HBM, DMA overlaps compute.
def make_dwconv_manual_kernel(block_h, KH, KW, C, WC, nH, apply_relu):
    tHp = block_h + KH - 1

    def kernel(x_hbm, w_ref, b_ref, o_ref, xbuf, sem):
        # x_hbm: (N, Hp, Wp*C) in HBM;  xbuf: VMEM (2, tHp, Wp*C);  sem: DMA(2,)
        n = pl.program_id(0)
        i = pl.program_id(1)
        slot = i % 2

        def tile_copy(tile_idx, slot_idx):
            start = pl.multiple_of(tile_idx * block_h, block_h)
            return pltpu.make_async_copy(
                x_hbm.at[n, pl.ds(start, tHp), :],
                xbuf.at[slot_idx],
                sem.at[slot_idx],
            )

        @pl.when(i == 0)                  # prime at the start of each image
        def _():
            tile_copy(i, slot).start()

        tile_copy(i, slot).wait()

        @pl.when(i + 1 < nH)              # prefetch next tile of the same image
        def _():
            tile_copy(i + 1, 1 - slot).start()

        x = xbuf[slot].astype(jnp.float32)
        y = _dwconv_compute(x, w_ref[...], b_ref[0, :], block_h, KH, KW, C, WC,
                            apply_relu)
        o_ref[0] = y.astype(o_ref.dtype)

    return kernel


# ----------------------------------------------------------------------------
# Wrapper
# ----------------------------------------------------------------------------
def dwconv_bn_relu(x, w_dw, gamma, beta, running_mean, running_var, *,
                   stride=1, eps=1e-5, activation="ReLU",
                   block_h=None, io_dtype=jnp.float32, channels_last=False,
                   vmem_tile_budget_bytes=24 << 20):
    """Depthwise conv (odd k, SAME autopad, stride 1) + BN(eval) + ReLU.

    x: (N, C, H, W) if channels_last=False (PyTorch layout), else (N, H, W, C).
    w_dw: (C, 1, KH, KW) depthwise conv weight (groups == C, bias=False).
    """
    # TODO(synk): stride != 1, even kernel sizes and non-depthwise group counts
    # (groups = gcd(in, out) != channels) of the original DWConv are not implemented.
    # TODO(synk): train-mode BatchNorm (batch statistics) is not implemented;
    # this is eval() semantics (running stats).
    assert stride == 1, "stride 1 only"
    assert activation in ("ReLU", None)
    apply_relu = activation == "ReLU"

    if channels_last:
        x_nhwc = x
        N, H, W, C = x.shape
    else:
        N, C, H, W = x.shape
        x_nhwc = jnp.transpose(x, (0, 2, 3, 1))

    Cout, cin_pg, KH, KW = w_dw.shape
    assert Cout == C and cin_pg == 1, "depthwise (groups == channels) only"
    assert KH % 2 == 1 and KW % 2 == 1, "odd kernel (SAME autopad) only"
    ph, pw = KH // 2, KW // 2

    # ---- lane packing: guarantee the OUTPUT lane dim W_out*C_pad % 128 == 0
    # (lane-dense unmasked stores); pad channels or width, whichever is smaller.
    cp_mult = 128 // math.gcd(W, 128)
    C_pad = -(-C // cp_mult) * cp_mult
    wp_mult = 128 // math.gcd(C, 128)
    W_out = -(-W // wp_mult) * wp_mult
    if W * C_pad <= W_out * C:
        W_out = W                         # pad channels only
    else:
        C_pad = C                         # pad width only
    WC = W_out * C_pad                    # packed output lane width (mult of 128)
    Wp = W_out + 2 * pw
    WpC = Wp * C_pad                      # packed input lane width
    Hp = H + 2 * ph

    # ---- glue (plain JAX): fold BN(eval) into the depthwise taps -----------
    scale = gamma / jnp.sqrt(running_var + eps)                  # (C,)
    bias = beta - running_mean * scale                           # (C,)
    w_khwc = jnp.transpose(w_dw[:, 0, :, :], (1, 2, 0)) * scale  # (KH,KW,C)
    if C_pad != C:
        w_khwc = jnp.pad(w_khwc, ((0, 0), (0, 0), (0, C_pad - C)))
        bias = jnp.pad(bias, (0, C_pad - C))
    w_lanes = jnp.tile(w_khwc.reshape(KH * KW, C_pad),
                       (1, W_out)).astype(jnp.float32)           # (KH*KW, WC)
    b_lanes = jnp.tile(bias.reshape(1, C_pad),
                       (1, W_out)).astype(jnp.float32)           # (1, WC)

    # ---- glue: one fused pad (spatial + channel) + dtype cast + lane pack --
    x_pack = jnp.pad(
        x_nhwc, ((0, 0), (ph, ph), (pw, W_out - W + pw), (0, C_pad - C))
    ).astype(io_dtype).reshape(N, Hp, WpC)                       # (N, Hp, Wp*C)

    # ---- tile selection against a generation-safe VMEM budget --------------
    io_bytes = jnp.dtype(io_dtype).itemsize
    w_vmem = 2 * (KH * KW + 1) * WC * 4

    def step_bytes(bh):
        return 2 * ((bh + KH - 1) * WpC + bh * WC) * io_bytes + w_vmem

    if block_h is None:
        block_h = H
        if step_bytes(H) > vmem_tile_budget_bytes:
            cands = [d for d in range(H, 0, -1)
                     if H % d == 0 and d % 8 == 0
                     and step_bytes(d) <= vmem_tile_budget_bytes]
            # TODO(synk): ragged last H-tile (H not divisible) is not implemented.
            assert cands, "no block_h fits the VMEM tile budget"
            block_h = cands[0]
    assert H % block_h == 0, "H must be divisible by block_h"
    nH = H // block_h
    use_manual = block_h < H
    if use_manual:
        assert block_h % 8 == 0, "manual halo-DMA path needs block_h % 8 == 0"
    # TODO(synk): for N == 1 on v7x (2 TensorCores), prefer splitting H so both
    # cores get work even when the whole slab fits VMEM.

    vmem_limit = int(min(48 << 20, max(32 << 20, step_bytes(block_h) + (8 << 20))))
    cparams = pltpu.CompilerParams(
        dimension_semantics=("parallel",) if not use_manual
        else ("parallel", "arbitrary"),
        vmem_limit_bytes=vmem_limit)

    if not use_manual:
        kernel = make_dwconv_auto_kernel(H, KH, KW, C_pad, WC, apply_relu)
        out = pl.pallas_call(
            kernel,
            out_shape=jax.ShapeDtypeStruct((N, H, WC), io_dtype),
            grid_spec=pltpu.PrefetchScalarGridSpec(
                num_scalar_prefetch=0,
                grid=(N,),
                in_specs=[
                    pl.BlockSpec((1, Hp, WpC), lambda n: (n, 0, 0)),
                    # constant index maps -> weights/bias DMA'd once
                    pl.BlockSpec((KH * KW, WC), lambda n: (0, 0)),
                    pl.BlockSpec((1, WC), lambda n: (0, 0)),
                ],
                out_specs=pl.BlockSpec((1, H, WC), lambda n: (n, 0, 0)),
            ),
            compiler_params=cparams,
        )(x_pack, w_lanes, b_lanes)
    else:
        kernel = make_dwconv_manual_kernel(block_h, KH, KW, C_pad, WC, nH,
                                           apply_relu)
        out = pl.pallas_call(
            kernel,
            out_shape=jax.ShapeDtypeStruct((N, H, WC), io_dtype),
            grid_spec=pltpu.PrefetchScalarGridSpec(
                num_scalar_prefetch=0,
                grid=(N, nH),
                in_specs=[
                    pl.BlockSpec(memory_space=pl.ANY),        # stays in HBM
                    pl.BlockSpec((KH * KW, WC), lambda n, i: (0, 0)),
                    pl.BlockSpec((1, WC), lambda n, i: (0, 0)),
                ],
                out_specs=pl.BlockSpec((1, block_h, WC),
                                       lambda n, i: (n, i, 0)),
                scratch_shapes=[
                    pltpu.VMEM((2, block_h + KH - 1, WpC), io_dtype),
                    pltpu.SemaphoreType.DMA((2,)),
                ],
            ),
            compiler_params=cparams,
        )(x_pack, w_lanes, b_lanes)

    out = out.reshape(N, H, W_out, C_pad)[:, :, :W, :C]          # trim lane pad
    if channels_last:
        return out
    return jnp.transpose(out, (0, 3, 1, 2))                      # back to NCHW


# ----------------------------------------------------------------------------
# Pure-JAX reference (lax depthwise conv + BN eval + ReLU), NCHW.
# ----------------------------------------------------------------------------
def reference(x_nchw, w_dw, gamma, beta, running_mean, running_var, eps=1e-5):
    C = x_nchw.shape[1]
    y = lax.conv_general_dilated(
        x_nchw, w_dw, window_strides=(1, 1), padding="SAME",
        feature_group_count=C, dimension_numbers=("NCHW", "OIHW", "NCHW"))
    scale = (gamma / jnp.sqrt(running_var + eps)).reshape(1, C, 1, 1)
    bias = (beta - running_mean * gamma / jnp.sqrt(running_var + eps)
            ).reshape(1, C, 1, 1)
    return jnp.maximum(y * scale + bias, 0.0)


if __name__ == "__main__":
    key = jax.random.PRNGKey(0)

    def make_inputs(N, C, H, W, K):
        kx, kw, kg, kb, km, kv = jax.random.split(
            jax.random.fold_in(key, C * 1000 + W), 6)
        x = jax.random.normal(kx, (N, C, H, W), dtype=jnp.float32)
        w_dw = jax.random.normal(kw, (C, 1, K, K), dtype=jnp.float32) * 0.2
        gamma = 1.0 + 0.1 * jax.random.normal(kg, (C,), dtype=jnp.float32)
        beta = 0.1 * jax.random.normal(kb, (C,), dtype=jnp.float32)
        rmean = 0.1 * jax.random.normal(km, (C,), dtype=jnp.float32)
        rvar = jnp.abs(jax.random.normal(kv, (C,), dtype=jnp.float32)) + 0.5
        return x, w_dw, gamma, beta, rmean, rvar

    # 1) naturally lane-dense shape (W*C = 128); whole-image slab, grid=(N,)=(2,)
    args = make_inputs(2, 8, 16, 16, 3)
    ref = reference(*args)
    out = jax.block_until_ready(dwconv_bn_relu(*args))
    assert out.shape == ref.shape
    assert jnp.allclose(out, ref, atol=2e-4, rtol=2e-4), "f32 auto path mismatch"

    # 2) bf16 activation I/O (f32 accumulation in-kernel; helps on all gens)
    out_bf16 = jax.block_until_ready(
        dwconv_bn_relu(*args, io_dtype=jnp.bfloat16))
    assert jnp.allclose(out_bf16.astype(jnp.float32), ref,
                        atol=5e-2, rtol=5e-2), "bf16 path mismatch"

    # 3) forced H-tiling -> manual double-buffered halo-DMA path (pl.ANY input)
    out_tiled = jax.block_until_ready(dwconv_bn_relu(*args, block_h=8))
    assert jnp.allclose(out_tiled, ref, atol=2e-4, rtol=2e-4), \
        "manual DMA path mismatch"

    # 4) C=4 -> channel lane padding keeps the output lane dim a multiple of 128
    args4 = make_inputs(2, 4, 16, 16, 3)
    ref4 = reference(*args4)
    out4 = jax.block_until_ready(dwconv_bn_relu(*args4))
    assert jnp.allclose(out4, ref4, atol=2e-4, rtol=2e-4), "C-pad path mismatch"

    # 5) W=12 -> width lane padding path
    args5 = make_inputs(2, 8, 16, 12, 3)
    ref5 = reference(*args5)
    out5 = jax.block_until_ready(dwconv_bn_relu(*args5))
    assert jnp.allclose(out5, ref5, atol=2e-4, rtol=2e-4), "W-pad path mismatch"

    # 6) channels_last entry point (drops the NCHW<->NHWC glue transposes)
    x_nhwc = jnp.transpose(args[0], (0, 2, 3, 1))
    out_cl = jax.block_until_ready(
        dwconv_bn_relu(x_nhwc, *args[1:], channels_last=True))
    assert jnp.allclose(jnp.transpose(out_cl, (0, 3, 1, 2)), ref,
                        atol=2e-4, rtol=2e-4), "channels_last path mismatch"

    print("KERNEL_OK")
</pallas_src>

<mosaic_0001>
module attributes {stable_mosaic.version = 11 : i64} {
  func.func @kernel(%arg0: i32, %arg1: memref<1x18x144xf32, #tpu.memory_space<vmem>>, %arg2: memref<9x128xf32, #tpu.memory_space<vmem>>, %arg3: memref<1x128xf32, #tpu.memory_space<vmem>>, %arg4: memref<1x16x128xf32, #tpu.memory_space<vmem>>) attributes {dimension_semantics = [#tpu.dimension_semantics<parallel>], iteration_bounds = array<i64: 2>, scalar_prefetch = 0 : i64, scratch_operands = 0 : i64, tpu.core_type = #tpu.core_type<tc>, window_params = [{transform_indices = @transform_0, window_bounds = array<i64: 1, 18, 144>}, {pipeline_mode = #tpu.pipeline_mode<synchronous>, transform_indices = @transform_1, window_bounds = array<i64: 9, 128>}, {pipeline_mode = #tpu.pipeline_mode<synchronous>, transform_indices = @transform_2, window_bounds = array<i64: 1, 128>}, {transform_indices = @transform_3, window_bounds = array<i64: 1, 16, 128>}]} {
    %c0 = arith.constant 0 : index
    %c0_0 = arith.constant 0 : index
    %c0_1 = arith.constant 0 : index
    %0 = vector.load %arg1[%c0, %c0_0, %c0_1] : memref<1x18x144xf32, #tpu.memory_space<vmem>>, vector<1x18x144xf32>
    %1 = vector.shape_cast %0 : vector<1x18x144xf32> to vector<18x144xf32>
    %c0_2 = arith.constant 0 : index
    %c0_3 = arith.constant 0 : index
    %2 = vector.load %arg2[%c0_2, %c0_3] : memref<9x128xf32, #tpu.memory_space<vmem>>, vector<9x128xf32>
    %c0_4 = arith.constant 0 : index
    %c0_5 = arith.constant 0 : index
    %3 = vector.load %arg3[%c0_4, %c0_5] : memref<1x128xf32, #tpu.memory_space<vmem>>, vector<1x128xf32>
    %4 = vector.shape_cast %3 : vector<1x128xf32> to vector<128xf32>
    %5 = vector.extract_strided_slice %1 {offsets = [0, 0], sizes = [18, 128], strides = [1, 1]} : vector<18x144xf32> to vector<18x128xf32>
    %6 = vector.extract_strided_slice %5 {offsets = [0, 0], sizes = [16, 128], strides = [1, 1]} : vector<18x128xf32> to vector<16x128xf32>
    %7 = vector.extract_strided_slice %2 {offsets = [0, 0], sizes = [1, 128], strides = [1, 1]} : vector<9x128xf32> to vector<1x128xf32>
    %8 = vector.shape_cast %7 : vector<1x128xf32> to vector<128xf32>
    %9 = vector.shape_cast %8 : vector<128xf32> to vector<1x128xf32>
    %10 = vector.broadcast %9 : vector<1x128xf32> to vector<16x128xf32>
    %11 = arith.mulf %6, %10 : vector<16x128xf32>
    %12 = vector.extract_strided_slice %5 {offsets = [1, 0], sizes = [16, 128], strides = [1, 1]} : vector<18x128xf32> to vector<16x128xf32>
    %13 = vector.extract_strided_slice %2 {offsets = [3, 0], sizes = [1, 128], strides = [1, 1]} : vector<9x128xf32> to vector<1x128xf32>
    %14 = vector.shape_cast %13 : vector<1x128xf32> to vector<128xf32>
    %15 = vector.shape_cast %14 : vector<128xf32> to vector<1x128xf32>
    %16 = vector.broadcast %15 : vector<1x128xf32> to vector<16x128xf32>
    %17 = arith.mulf %12, %16 : vector<16x128xf32>
    %18 = arith.addf %11, %17 : vector<16x128xf32>
    %19 = vector.extract_strided_slice %5 {offsets = [2, 0], sizes = [16, 128], strides = [1, 1]} : vector<18x128xf32> to vector<16x128xf32>
    %20 = vector.extract_strided_slice %2 {offsets = [6, 0], sizes = [1, 128], strides = [1, 1]} : vector<9x128xf32> to vector<1x128xf32>
    %21 = vector.shape_cast %20 : vector<1x128xf32> to vector<128xf32>
    %22 = vector.shape_cast %21 : vector<128xf32> to vector<1x128xf32>
    %23 = vector.broadcast %22 : vector<1x128xf32> to vector<16x128xf32>
    %24 = arith.mulf %19, %23 : vector<16x128xf32>
    %25 = arith.addf %18, %24 : vector<16x128xf32>
    %26 = vector.extract_strided_slice %1 {offsets = [0, 8], sizes = [18, 128], strides = [1, 1]} : vector<18x144xf32> to vector<18x128xf32>
    %27 = vector.extract_strided_slice %26 {offsets = [0, 0], sizes = [16, 128], strides = [1, 1]} : vector<18x128xf32> to vector<16x128xf32>
    %28 = vector.extract_strided_slice %2 {offsets = [1, 0], sizes = [1, 128], strides = [1, 1]} : vector<9x128xf32> to vector<1x128xf32>
    %29 = vector.shape_cast %28 : vector<1x128xf32> to vector<128xf32>
    %30 = vector.shape_cast %29 : vector<128xf32> to vector<1x128xf32>
    %31 = vector.broadcast %30 : vector<1x128xf32> to vector<16x128xf32>
    %32 = arith.mulf %27, %31 : vector<16x128xf32>
    %33 = arith.addf %25, %32 : vector<16x128xf32>
    %34 = vector.extract_strided_slice %26 {offsets = [1, 0], sizes = [16, 128], strides = [1, 1]} : vector<18x128xf32> to vector<16x128xf32>
    %35 = vector.extract_strided_slice %2 {offsets = [4, 0], sizes = [1, 128], strides = [1, 1]} : vector<9x128xf32> to vector<1x128xf32>
    %36 = vector.shape_cast %35 : vector<1x128xf32> to vector<128xf32>
    %37 = vector.shape_cast %36 : vector<128xf32> to vector<1x128xf32>
    %38 = vector.broadcast %37 : vector<1x128xf32> to vector<16x128xf32>
    %39 = arith.mulf %34, %38 : vector<16x128xf32>
    %40 = arith.addf %33, %39 : vector<16x128xf32>
    %41 = vector.extract_strided_slice %26 {offsets = [2, 0], sizes = [16, 128], strides = [1, 1]} : vector<18x128xf32> to vector<16x128xf32>
    %42 = vector.extract_strided_slice %2 {offsets = [7, 0], sizes = [1, 128], strides = [1, 1]} : vector<9x128xf32> to vector<1x128xf32>
    %43 = vector.shape_cast %42 : vector<1x128xf32> to vector<128xf32>
    %44 = vector.shape_cast %43 : vector<128xf32> to vector<1x128xf32>
    %45 = vector.broadcast %44 : vector<1x128xf32> to vector<16x128xf32>
    %46 = arith.mulf %41, %45 : vector<16x128xf32>
    %47 = arith.addf %40, %46 : vector<16x128xf32>
    %48 = vector.extract_strided_slice %1 {offsets = [0, 16], sizes = [18, 128], strides = [1, 1]} : vector<18x144xf32> to vector<18x128xf32>
    %49 = vector.extract_strided_slice %48 {offsets = [0, 0], sizes = [16, 128], strides = [1, 1]} : vector<18x128xf32> to vector<16x128xf32>
    %50 = vector.extract_strided_slice %2 {offsets = [2, 0], sizes = [1, 128], strides = [1, 1]} : vector<9x128xf32> to vector<1x128xf32>
    %51 = vector.shape_cast %50 : vector<1x128xf32> to vector<128xf32>
    %52 = vector.shape_cast %51 : vector<128xf32> to vector<1x128xf32>
    %53 = vector.broadcast %52 : vector<1x128xf32> to vector<16x128xf32>
    %54 = arith.mulf %49, %53 : vector<16x128xf32>
    %55 = arith.addf %47, %54 : vector<16x128xf32>
    %56 = vector.extract_strided_slice %48 {offsets = [1, 0], sizes = [16, 128], strides = [1, 1]} : vector<18x128xf32> to vector<16x128xf32>
    %57 = vector.extract_strided_slice %2 {offsets = [5, 0], sizes = [1, 128], strides = [1, 1]} : vector<9x128xf32> to vector<1x128xf32>
    %58 = vector.shape_cast %57 : vector<1x128xf32> to vector<128xf32>
    %59 = vector.shape_cast %58 : vector<128xf32> to vector<1x128xf32>
    %60 = vector.broadcast %59 : vector<1x128xf32> to vector<16x128xf32>
    %61 = arith.mulf %56, %60 : vector<16x128xf32>
    %62 = arith.addf %55, %61 : vector<16x128xf32>
    %63 = vector.extract_strided_slice %48 {offsets = [2, 0], sizes = [16, 128], strides = [1, 1]} : vector<18x128xf32> to vector<16x128xf32>
    %64 = vector.extract_strided_slice %2 {offsets = [8, 0], sizes = [1, 128], strides = [1, 1]} : vector<9x128xf32> to vector<1x128xf32>
    %65 = vector.shape_cast %64 : vector<1x128xf32> to vector<128xf32>
    %66 = vector.shape_cast %65 : vector<128xf32> to vector<1x128xf32>
    %67 = vector.broadcast %66 : vector<1x128xf32> to vector<16x128xf32>
    %68 = arith.mulf %63, %67 : vector<16x128xf32>
    %69 = arith.addf %62, %68 : vector<16x128xf32>
    %70 = vector.shape_cast %4 : vector<128xf32> to vector<1x128xf32>
    %71 = vector.broadcast %70 : vector<1x128xf32> to vector<16x128xf32>
    %72 = arith.addf %69, %71 : vector<16x128xf32>
    %cst = arith.constant 0.000000e+00 : f32
    %73 = vector.broadcast %cst : f32 to vector<16x128xf32>
    %74 = arith.maximumf %72, %73 : vector<16x128xf32>
    %c0_6 = arith.constant 0 : index
    %c0_7 = arith.constant 0 : index
    %c0_8 = arith.constant 0 : index
    %75 = vector.load %arg4[%c0_6, %c0_7, %c0_8] : memref<1x16x128xf32, #tpu.memory_space<vmem>>, vector<1x16x128xf32>
    %76 = vector.shape_cast %75 : vector<1x16x128xf32> to vector<16x128xf32>
    %77 = vector.shape_cast %74 : vector<16x128xf32> to vector<1x16x128xf32>
    tpu.vector_store %arg4[%c0_6, %c0_7, %c0_8], %77 {strides = array<i32>} : memref<1x16x128xf32, #tpu.memory_space<vmem>>, vector<1x16x128xf32>,
    return
  }
  func.func @transform_0(%arg0: i32) -> (i32, i32, i32) {
    %c0_i32 = arith.constant 0 : i32
    %c0_i32_0 = arith.constant 0 : i32
    %c0_i32_1 = arith.constant 0 : i32
    return %arg0, %c0_i32, %c0_i32_0 : i32, i32, i32
  }
  func.func @transform_1(%arg0: i32) -> (i32, i32) {
    %c0_i32 = arith.constant 0 : i32
    %c0_i32_0 = arith.constant 0 : i32
    %c0_i32_1 = arith.constant 0 : i32
    return %c0_i32, %c0_i32_0 : i32, i32
  }
  func.func @transform_2(%arg0: i32) -> (i32, i32) {
    %c0_i32 = arith.constant 0 : i32
    %c0_i32_0 = arith.constant 0 : i32
    %c0_i32_1 = arith.constant 0 : i32
    return %c0_i32, %c0_i32_0 : i32, i32
  }
  func.func @transform_3(%arg0: i32) -> (i32, i32, i32) {
    %c0_i32 = arith.constant 0 : i32
    %c0_i32_0 = arith.constant 0 : i32
    %c0_i32_1 = arith.constant 0 : i32
    return %arg0, %c0_i32, %c0_i32_0 : i32, i32, i32
  }
}

</mosaic_0001>

<llo_original>
// kernel: tpu_custom_call.1
$region0: #{tpu_custom_call.1}
  #allocation0 [shape = 'u32[]', space=smem, size = 0x4, offset = 0x4, fixed_abs, tag = 'smem constant byte address 0x4 - core index']
  #allocation1 [shape = 'u32[144,128]{1,0:T(1,128)}', space=vmem, size = 0x12000, scoped, tag = 'internal scratch']
  %s0 = inlined_call_operand.vmem [shape: f32[2,18,144], index: 0, kind: input, shape index: {}]
  %s1 = inlined_call_operand.vmem [shape: f32[9,128], index: 1, kind: input, shape index: {}]
  %s2 = inlined_call_operand.vmem [shape: f32[1,128], index: 2, kind: input, shape index: {}]
  %s3 = inlined_call_operand.hbm [shape: f32[2,16,128], index: 3, kind: output, shape index: {}]
  %s4 = sld [smem:[#allocation0]]
  $region45: #{tpu_custom_call.1} parent=0
    _
  %s6 = ssub.s32 1, %s4
  %s7 = scalar_select 0, %s6, %s4
  $region1: #{tpu_custom_call.1} parent=0
    #allocation2 [shape = 'u8[16384]{0}', space=vmem, size = 0x4000, scoped, tag = 'output window, operand 0']
    #allocation3 [shape = 's32[2]{0}', space=sflag, size = 0x8, scoped, tag = 'scoped memory for tpu_custom_call.1']
    %8 = vsyncpa [#allocation3], 0
    %s9 = scalar_lea.sflag [#allocation3], 1
    %10 = vsyncpa %s9, 0
    loop: start=0, step=1, limit=4
    $region2: #{tpu_custom_call.1} parent=1 // loop_pre_header
      _
    $region3: #{tpu_custom_call.1} parent=1 // loop_header
      %s12 = sphi 0, %s16
      %p13 = scmp.ge.s32.totalorder %s12, 4
      %s22 = sphi 0, %s24
      %s25 = sphi 0, %s22
      %s26 = sphi 0, %s25
      %s42 = sphi 0, %s26
      %s46 = sphi 0, %s46
      %s48 = sphi 0, %s46
      %s49 = sphi 0, %s48
      %s63 = sphi 0, %s49
      %s67 = sphi 0, %s67
      %s69 = sphi 0, %s67
      %s70 = sphi 0, %s69
      %s84 = sphi 0, %s70
      %s90 = sphi 0, %s92
      %s93 = sphi 0, %s90
      %s94 = sphi 0, %s93
      %s110 = sphi 0, %s94
    $region4: #{tpu_custom_call.1} parent=1 // loop_header_branch
      %15 = sbr.rel (%p13) target = $region8
    $region5: #{tpu_custom_call.1} parent=1 // loop_body
      %s17 = ssub.s32 %s12, 1
      %s18 = ssub.s32 %s12, 2
      %s19 = sadd.s32 %s12, 1
      %s20 = ssub.s32 %s12, %s19
      %p21 = scmp.eq.s32.totalorder %s20, 0
      %s23 = sadd.s32 %s22, 1
      %s24 = scalar_select %p21, %s22, %s23
      %p27 = pneg %p21
      %p28 = scmp.eq.s32.totalorder %s12, 1
      %p29 = por %p27, %p28
      %p30 = scmp.ne.s32.totalorder %s22, %s25
      %p31 = scmp.eq.s32.totalorder %s12, 0
      %p32 = por %p30, %p31
      %p33 = scmp.ne.s32.totalorder %s22, %s25
      %p34 = scmp.eq.s32.totalorder %s17, 1
      %p35 = por %p33, %p34
      %p36 = scmp.ne.s32.totalorder %s25, %s26
      %p37 = scmp.eq.s32.totalorder %s17, 0
      %p38 = por %p36, %p37
      %p39 = scmp.ne.s32.totalorder %s25, %s26
      %p40 = scmp.eq.s32.totalorder %s18, 1
      %p41 = por %p39, %p40
      %p43 = scmp.ne.s32.totalorder %s26, %s42
      %p44 = scmp.eq.s32.totalorder %s18, 0
      %p45 = por %p43, %p44
      %s47 = sadd.s32 %s46, 1
      %p50 = scmp.eq.s32.totalorder %s12, 1
      %p51 = scmp.ne.s32.totalorder %s46, %s48
      %p52 = scmp.eq.s32.totalorder %s12, 0
      %p53 = por %p51, %p52
      %p54 = scmp.ne.s32.totalorder %s46, %s48
      %p55 = scmp.eq.s32.totalorder %s17, 1
      %p56 = por %p54, %p55
      %p57 = scmp.ne.s32.totalorder %s48, %s49
      %p58 = scmp.eq.s32.totalorder %s17, 0
      %p59 = por %p57, %p58
      %p60 = scmp.ne.s32.totalorder %s48, %s49
      %p61 = scmp.eq.s32.totalorder %s18, 1
      %p62 = por %p60, %p61
      %p64 = scmp.ne.s32.totalorder %s49, %s63
      %p65 = scmp.eq.s32.totalorder %s18, 0
      %p66 = por %p64, %p65
      %s68 = sadd.s32 %s67, 1
      %p71 = scmp.eq.s32.totalorder %s12, 1
      %p72 = scmp.ne.s32.totalorder %s67, %s69
      %p73 = scmp.eq.s32.totalorder %s12, 0
      %p74 = por %p72, %p73
      %p75 = scmp.ne.s32.totalorder %s67, %s69
      %p76 = scmp.eq.s32.totalorder %s17, 1
      %p77 = por %p75, %p76
      %p78 = scmp.ne.s32.totalorder %s69, %s70
      %p79 = scmp.eq.s32.totalorder %s17, 0
      %p80 = por %p78, %p79
      %p81 = scmp.ne.s32.totalorder %s69, %s70
      %p82 = scmp.eq.s32.totalorder %s18, 1
      %p83 = por %p81, %p82
      %p85 = scmp.ne.s32.totalorder %s70, %s84
      %p86 = scmp.eq.s32.totalorder %s18, 0
      %p87 = por %p85, %p86
      %s88 = ssub.s32 %s12, %s19
      %p89 = scmp.eq.s32.totalorder %s88, 0
      %s91 = sadd.s32 %s90, 1
      %s92 = scalar_select %p89, %s90, %s91
      %p95 = pneg %p89
      %p96 = scmp.eq.s32.totalorder %s12, 1
      %p97 = por %p95, %p96
      %p98 = scmp.ne.s32.totalorder %s90, %s93
      %p99 = scmp.eq.s32.totalorder %s12, 0
      %p100 = por %p98, %p99
      %p101 = scmp.ne.s32.totalorder %s90, %s93
      %p102 = scmp.eq.s32.totalorder %s17, 1
      %p103 = por %p101, %p102
      %p104 = scmp.ne.s32.totalorder %s93, %s94
      %p105 = scmp.eq.s32.totalorder %s17, 0
      %p106 = por %p104, %p105
      %p107 = scmp.ne.s32.totalorder %s93, %s94
      %p108 = scmp.eq.s32.totalorder %s18, 1
      %p109 = por %p107, %p108
      %p111 = scmp.ne.s32.totalorder %s94, %s110
      %p112 = scmp.eq.s32.totalorder %s18, 0
      %p113 = por %p111, %p112
      %p114 = scmp.le.s32.totalorder 1, %s12
      %p115 = scmp.lt.s32.totalorder %s12, 3
      %p116 = pnand %p114, %p115
      %p117 = pneg %p116
      // Predicated region
      $region9: #{tpu_custom_call.1} parent=5 // pred_check
        _
      $region10: #{tpu_custom_call.1} parent=5 // pred_check_branch
        %119 = sbr.rel (%p116) target = $region12
      $region11: #{tpu_custom_call.1} parent=5 // pred_region
        %s120 = ssub.s32 %s12, 1
        // Predicated region
        $region13: #{tpu_custom_call.1} parent=11 // pred_check
          %p121 = pneg %p59
        $region14: #{tpu_custom_call.1} parent=11 // pred_check_branch
          %123 = sbr.rel (%p121) target = $region16
        $region15: #{tpu_custom_call.1} parent=11 // pred_region
          _
        $region16: #{tpu_custom_call.1} parent=11 // pred_fallthru
          _
        // Predicated region
        $region17: #{tpu_custom_call.1} parent=11 // pred_check
          %p124 = pneg %p80
        $region18: #{tpu_custom_call.1} parent=11 // pred_check_branch
          %126 = sbr.rel (%p124) target = $region20
        $region19: #{tpu_custom_call.1} parent=11 // pred_region
          _
        $region20: #{tpu_custom_call.1} parent=11 // pred_fallthru
          _
      $region12: #{tpu_custom_call.1} parent=5 // pred_fallthru
        _
      %p127 = scmp.lt.s32.totalorder %s12, 2
      // Predicated region
      $region21: #{tpu_custom_call.1} parent=5 // pred_check
        %p128 = pneg %p127
      $region22: #{tpu_custom_call.1} parent=5 // pred_check_branch
        %130 = sbr.rel (%p128) target = $region24
      $region23: #{tpu_custom_call.1} parent=5 // pred_region
        // Predicated region
        $region25: #{tpu_custom_call.1} parent=23 // pred_check
          %p131 = pneg %p32
        $region26: #{tpu_custom_call.1} parent=23 // pred_check_branch
          %133 = sbr.rel (%p131) target = $region28
        $region27: #{tpu_custom_call.1} parent=23 // pred_region
          %p134 = scmp.lt.s32.totalorder %s12, 1
          %s135 = scalar_select %p134, %s12, 1
          %s136 = smul.addr %s135, 6
          %s137 = smul.addr %s136, 8
          %s138 = scalar_lea.vmem %s0, %s137
        $region28: #{tpu_custom_call.1} parent=23 // pred_fallthru
          _
      $region24: #{tpu_custom_call.1} parent=5 // pred_fallthru
        _
      %p139 = scmp.le.s32.totalorder 1, %s12
      %p140 = scmp.lt.s32.totalorder %s12, 3
      %p141 = pnand %p139, %p140
      %p142 = pneg %p141
      // Predicated region
      $region29: #{tpu_custom_call.1} parent=5 // pred_check
        _
      $region30: #{tpu_custom_call.1} parent=5 // pred_check_branch
        %144 = sbr.rel (%p141) target = $region32
      $region31: #{tpu_custom_call.1} parent=5 // pred_region
        %s145 = ssub.s32 %s12, 1
        %p146 = scmp.lt.s32.totalorder %s17, 1
        %s147 = scalar_select %p146, %s17, 1
        %s148 = smul.addr %s147, 6
        %s149 = smul.addr %s148, 8
        %s150 = scalar_lea.vmem %s0, %s149
        %p151 = pneg %p38
        %p152 = pneg %p35
        %p153 = pneg %p59
        %p154 = pneg %p56
        %p155 = pneg %p80
        %p156 = pneg %p77
        %p157 = pneg %p106
        %p158 = pneg %p103
        %s159 = sand.u32 %s93, 1
        %s160 = scalar_lea.sflag [#allocation3], %s159
        %s161 = sand.u32 %s93, 1
        %s162 = smul.addr %s161, 16
        %s163 = scalar_lea.vmem [#allocation2], %s162
        %p164 = scmp.lt.s32.totalorder %s17, 1
        %s165 = scalar_select %p164, %s17, 1
        %s166 = smul.addr %s165, 6
        %s167 = smul.addr %s166, 8
        %s168 = scalar_lea.vmem %s0, %s167
        %v169 = vld [vmem:[%s168] sm:$0xff]
        %v170 = vld [vmem:[%s168 + $0x8] sm:$0xff]
        %v171 = vld [vmem:[%s168 + $0x10] sm:$0xff]
        %v172 = vld [vmem:[%s168 + $0x18] sm:$0xff]
        %v173 = vld [vmem:[%s168 + $0x20] sm:$0x3]
        %v174 = vld [vmem:[%s168 + $0x28] sm:$0x3]
        %v175 = vld [vmem:[%s1] sm:$0xff]
        %v176 = vld [vmem:[%s1 + $0x8] sm:$0x1]
        %v177 = vld [vmem:[%s2] sm:$0x1]
        %v178 = vlaneseq
        %v179 = vshrl.u32 %v178, 7
        %v180 = vsub.s32 0, %v179
        %v181 = vrot.slane %v175, %v180
        %v182 = vmul.f32 %v169, %v181
        %v183 = vmul.f32 %v171, %v181
        %v184 = vlaneseq
        %v185 = vshrl.u32 %v184, 7
        %v186 = vsub.s32 3, %v185
        %v187 = vrot.slane %v175, %v186
        %v188 = vmul.f32 %v169, %v187
        %v189 = vmul.f32 %v171, %v187
        %v190 = vmul.f32 %v173, %v187
        %vm194 = vcmask 1046528
        %v195 = vrot.slane %v188, 1
        %v196 = vrot.slane %v189, 1
        %v197 = vsel %vm194, %v195, %v196
        %v198 = vrot.slane %v190, 1
        %v199 = vsel %vm194, %v196, %v198
        %v202 = vadd.f32 %v182, %v197
        %v203 = vadd.f32 %v183, %v199
        %v204 = vlaneseq
        %v205 = vshrl.u32 %v204, 7
        %v206 = vsub.s32 6, %v205
        %v207 = vrot.slane %v175, %v206
        %v208 = vmul.f32 %v169, %v207
        %v209 = vmul.f32 %v171, %v207
        %v210 = vmul.f32 %v173, %v207
        %vm214 = vcmask 1045504
        %v215 = vrot.slane %v208, 2
        %v216 = vrot.slane %v209, 2
        %v217 = vsel %vm214, %v215, %v216
        %v218 = vrot.slane %v210, 2
        %v219 = vsel %vm214, %v216, %v218
        %v222 = vadd.f32 %v202, %v217
        %v223 = vadd.f32 %v203, %v219
        %v224 = vlaneseq
        %v225 = vshrl.u32 %v224, 7
        %v226 = vsub.s32 1, %v225
        %v227 = vrot.slane %v175, %v226
        %229 = vrot.lane.b32.xlu0 %v227, 8
        %v230 = vpop.permute.xlu0 %229
        %v232 = vmul.f32 %v169, %v230
        %v233 = vmul.f32 %v170, %v230
        %v234 = vmul.f32 %v171, %v230
        %v235 = vmul.f32 %v172, %v230
        %240 = vrot.lane.b32.xlu0 %v232, 120
        %v241 = vpop.permute.xlu0 %240
        %242 = vrot.lane.b32.xlu0 %v233, 120
        %v243 = vpop.permute.xlu0 %242
        %244 = vrot.lane.b32.xlu0 %v234, 120
        %v245 = vpop.permute.xlu0 %244
        %246 = vrot.lane.b32.xlu0 %v235, 120
        %v247 = vpop.permute.xlu0 %246
        %vm248 = vcmask 982016
        %v249 = vsel %vm248, %v241, %v243
        %v250 = vsel %vm248, %v245, %v247
        %v253 = vadd.f32 %v222, %v249
        %v254 = vadd.f32 %v223, %v250
        %v255 = vlaneseq
        %v256 = vshrl.u32 %v255, 7
        %v257 = vsub.s32 4, %v256
        %v258 = vrot.slane %v175, %v257
        %260 = vrot.lane.b32.xlu0 %v258, 8
        %v261 = vpop.permute.xlu0 %260
        %v263 = vmul.f32 %v169, %v261
        %v264 = vmul.f32 %v170, %v261
        %v265 = vmul.f32 %v171, %v261
        %v266 = vmul.f32 %v172, %v261
        %v267 = vmul.f32 %v173, %v261
        %v268 = vmul.f32 %v174, %v261
        %v275 = vrot.slane %v263, 1
        %v276 = vrot.slane %v265, 1
        %v277 = vsel %vm194, %v275, %v276
        %v278 = vrot.slane %v264, 1
        %v279 = vrot.slane %v266, 1
        %v280 = vsel %vm194, %v278, %v279
        %v281 = vrot.slane %v267, 1
        %v282 = vsel %vm194, %v276, %v281
        %v283 = vrot.slane %v268, 1
        %v284 = vsel %vm194, %v279, %v283
        %285 = vrot.lane.b32.xlu0 %v277, 120
        %v286 = vpop.permute.xlu0 %285
        %287 = vrot.lane.b32.xlu0 %v280, 120
        %v288 = vpop.permute.xlu0 %287
        %289 = vrot.lane.b32.xlu0 %v282, 120
        %v290 = vpop.permute.xlu0 %289
        %291 = vrot.lane.b32.xlu0 %v284, 120
        %v292 = vpop.permute.xlu0 %291
        %v293 = vsel %vm248, %v286, %v288
        %v294 = vsel %vm248, %v290, %v292
        %v297 = vadd.f32 %v253, %v293
        %v298 = vadd.f32 %v254, %v294
        %v299 = vlaneseq
        %v300 = vshrl.u32 %v299, 7
        %v301 = vsub.s32 7, %v300
        %v302 = vrot.slane %v175, %v301
        %304 = vrot.lane.b32.xlu0 %v302, 8
        %v305 = vpop.permute.xlu0 %304
        %v307 = vmul.f32 %v169, %v305
        %v308 = vmul.f32 %v170, %v305
        %v309 = vmul.f32 %v171, %v305
        %v310 = vmul.f32 %v172, %v305
        %v311 = vmul.f32 %v173, %v305
        %v312 = vmul.f32 %v174, %v305
        %v319 = vrot.slane %v307, 2
        %v320 = vrot.slane %v309, 2
        %v321 = vsel %vm214, %v319, %v320
        %v322 = vrot.slane %v308, 2
        %v323 = vrot.slane %v310, 2
        %v324 = vsel %vm214, %v322, %v323
        %v325 = vrot.slane %v311, 2
        %v326 = vsel %vm214, %v320, %v325
        %v327 = vrot.slane %v312, 2
        %v328 = vsel %vm214, %v323, %v327
        %329 = vrot.lane.b32.xlu0 %v321, 120
        %v330 = vpop.permute.xlu0 %329
        %331 = vrot.lane.b32.xlu0 %v324, 120
        %v332 = vpop.permute.xlu0 %331
        %333 = vrot.lane.b32.xlu0 %v326, 120
        %v334 = vpop.permute.xlu0 %333
        %335 = vrot.lane.b32.xlu0 %v328, 120
        %v336 = vpop.permute.xlu0 %335
        %v337 = vsel %vm248, %v330, %v332
        %v338 = vsel %vm248, %v334, %v336
        %v341 = vadd.f32 %v297, %v337
        %v342 = vadd.f32 %v298, %v338
        %v343 = vlaneseq
        %v344 = vshrl.u32 %v343, 7
        %v345 = vsub.s32 2, %v344
        %v346 = vrot.slane %v175, %v345
        %348 = vrot.lane.b32.xlu0 %v346, 16
        %v349 = vpop.permute.xlu0 %348
        %v351 = vmul.f32 %v169, %v349
        %v352 = vmul.f32 %v170, %v349
        %v353 = vmul.f32 %v171, %v349
        %v354 = vmul.f32 %v172, %v349
        %359 = vrot.lane.b32.xlu0 %v351, 112
        %v360 = vpop.permute.xlu0 %359
        %361 = vrot.lane.b32.xlu0 %v352, 112
        %v362 = vpop.permute.xlu0 %361
        %363 = vrot.lane.b32.xlu0 %v353, 112
        %v364 = vpop.permute.xlu0 %363
        %365 = vrot.lane.b32.xlu0 %v354, 112
        %v366 = vpop.permute.xlu0 %365
        %vm367 = vcmask 916480
        %v368 = vsel %vm367, %v360, %v362
        %v369 = vsel %vm367, %v364, %v366
        %v372 = vadd.f32 %v341, %v368
        %v373 = vadd.f32 %v342, %v369
        %v374 = vlaneseq
        %v375 = vshrl.u32 %v374, 7
        %v376 = vsub.s32 5, %v375
        %v377 = vrot.slane %v175, %v376
        %379 = vrot.lane.b32.xlu0 %v377, 16
        %v380 = vpop.permute.xlu0 %379
        %v382 = vmul.f32 %v169, %v380
        %v383 = vmul.f32 %v170, %v380
        %v384 = vmul.f32 %v171, %v380
        %v385 = vmul.f32 %v172, %v380
        %v386 = vmul.f32 %v173, %v380
        %v387 = vmul.f32 %v174, %v380
        %v394 = vrot.slane %v382, 1
        %v395 = vrot.slane %v384, 1
        %v396 = vsel %vm194, %v394, %v395
        %v397 = vrot.slane %v383, 1
        %v398 = vrot.slane %v385, 1
        %v399 = vsel %vm194, %v397, %v398
        %v400 = vrot.slane %v386, 1
        %v401 = vsel %vm194, %v395, %v400
        %v402 = vrot.slane %v387, 1
        %v403 = vsel %vm194, %v398, %v402
        %404 = vrot.lane.b32.xlu0 %v396, 112
        %v405 = vpop.permute.xlu0 %404
        %406 = vrot.lane.b32.xlu0 %v399, 112
        %v407 = vpop.permute.xlu0 %406
        %408 = vrot.lane.b32.xlu0 %v401, 112
        %v409 = vpop.permute.xlu0 %408
        %410 = vrot.lane.b32.xlu0 %v403, 112
        %v411 = vpop.permute.xlu0 %410
        %v412 = vsel %vm367, %v405, %v407
        %v413 = vsel %vm367, %v409, %v411
        %v416 = vadd.f32 %v372, %v412
        %v417 = vadd.f32 %v373, %v413
        %v418 = vlaneseq
        %v419 = vshrl.u32 %v418, 7
        %v420 = vsub.s32 0, %v419
        %v421 = vrot.slane %v176, %v420
        %423 = vrot.lane.b32.xlu0 %v421, 16
        %v424 = vpop.permute.xlu0 %423
        %v426 = vmul.f32 %v169, %v424
        %v427 = vmul.f32 %v170, %v424
        %v428 = vmul.f32 %v171, %v424
        %v429 = vmul.f32 %v172, %v424
        %v430 = vmul.f32 %v173, %v424
        %v431 = vmul.f32 %v174, %v424
        %v438 = vrot.slane %v426, 2
        %v439 = vrot.slane %v428, 2
        %v440 = vsel %vm214, %v438, %v439
        %v441 = vrot.slane %v427, 2
        %v442 = vrot.slane %v429, 2
        %v443 = vsel %vm214, %v441, %v442
        %v444 = vrot.slane %v430, 2
        %v445 = vsel %vm214, %v439, %v444
        %v446 = vrot.slane %v431, 2
        %v447 = vsel %vm214, %v442, %v446
        %448 = vrot.lane.b32.xlu0 %v440, 112
        %v449 = vpop.permute.xlu0 %448
        %450 = vrot.lane.b32.xlu0 %v443, 112
        %v451 = vpop.permute.xlu0 %450
        %452 = vrot.lane.b32.xlu0 %v445, 112
        %v453 = vpop.permute.xlu0 %452
        %454 = vrot.lane.b32.xlu0 %v447, 112
        %v455 = vpop.permute.xlu0 %454
        %v456 = vsel %vm367, %v449, %v451
        %v457 = vsel %vm367, %v453, %v455
        %v460 = vadd.f32 %v416, %v456
        %v461 = vadd.f32 %v417, %v457
        %v463 = vlaneseq
        %v464 = vshrl.u32 %v463, 7
        %v465 = vsub.s32 0, %v464
        %v466 = vrot.slane %v177, %v465
        %v468 = vadd.f32 %v460, %v466
        %v469 = vadd.f32 %v461, %v466
        %v470 = vmax.f32 %v468, 0.0
        %v471 = vmax.f32 %v469, 0.0
        %472 = vst [vmem:[%s163] sm:$0xff] %v470
        %473 = vst [vmem:[%s163 + $0x8] sm:$0xff] %v471
        %s474 = sand.u32 %s93, 1
        %s475 = scalar_lea.sflag [#allocation3], %s474
        %s476 = sand.u32 %s93, 1
        %s477 = smul.addr %s476, 16
        %s478 = scalar_lea.vmem [#allocation2], %s477
        // Predicated region
        $region33: #{tpu_custom_call.1} parent=31 // pred_check
          %p479 = pneg %p103
        $region34: #{tpu_custom_call.1} parent=31 // pred_check_branch
          %481 = sbr.rel (%p479) target = $region36
        $region35: #{tpu_custom_call.1} parent=31 // pred_region
          %s483 = ssub.s32 256, 256
          %484 = vsyncadd %s475, %s483
          %s485 = smul.addr %s17, 2
          %s486 = smul.addr %s485, 128
          %s487 = scalar_lea.hbm %s3, %s486
          %s488 = sshll.u32 %s478, 4
          %s489 = int_to_ptr.vmem [resolvable:$true] %s488
          %494 = dma.vmem_to_hbm [thread:$0]  %s489, 256, %s487, %s475, 128, 128, 8
        $region36: #{tpu_custom_call.1} parent=31 // pred_fallthru
          _
      $region32: #{tpu_custom_call.1} parent=5 // pred_fallthru
        _
      %p495 = scmp.le.s32.totalorder 2, %s12
      // Predicated region
      $region37: #{tpu_custom_call.1} parent=5 // pred_check
        %p496 = pneg %p495
      $region38: #{tpu_custom_call.1} parent=5 // pred_check_branch
        %498 = sbr.rel (%p496) target = $region40
      $region39: #{tpu_custom_call.1} parent=5 // pred_region
        %s499 = ssub.s32 %s12, 2
        // Predicated region
        $region41: #{tpu_custom_call.1} parent=39 // pred_check
          %p500 = pneg %p109
        $region42: #{tpu_custom_call.1} parent=39 // pred_check_branch
          %502 = sbr.rel (%p500) target = $region44
        $region43: #{tpu_custom_call.1} parent=39 // pred_region
          %s503 = sand.u32 %s94, 1
          %s504 = scalar_lea.sflag [#allocation3], %s503
          %s505 = sand.u32 %s94, 1
          %s506 = smul.addr %s505, 16
          %s507 = scalar_lea.vmem [#allocation2], %s506
          %508 = dma.done %s504, 256
        $region44: #{tpu_custom_call.1} parent=39 // pred_fallthru
          _
      $region40: #{tpu_custom_call.1} parent=5 // pred_fallthru
        _
    $region6: #{tpu_custom_call.1} parent=1 // loop_footer
      %s16 = sadd.s32 1, %s12
    $region7: #{tpu_custom_call.1} parent=1 // loop_footer_branch
      %11 = sbr.rel target = $region3
    $region8: #{tpu_custom_call.1} parent=1 // loop_exit
      _
    %509 = vsyncpa [#allocation3], 1
    %s510 = scalar_lea.sflag [#allocation3], 1
    %511 = vsyncpa %s510, 1

</llo_original>
